<compile_context>
chip_gen: v5e
topology: v5e:2x2
jax: 0.10.0
libtpu: 0.0.40
codegen_flags: <defaults>
</compile_context>

<pallas_src>
import functools

import jax
import jax.numpy as jnp
from jax.experimental import pallas as pl
from jax.experimental.pallas import tpu as pltpu


# ----------------------------------------------------------------------------
# Pass 1: conv(3x3, s=2, p=1) + maxpool(2, s=2) + concat + partial BN stats.
# Input is space-to-depth: xs2d[n, oh, ow, (dy*2+dx)*Cin + c] = x[n, c, 2*oh+dy, 2*ow+dx].
# Grid: one step per batch element ("parallel").
# ----------------------------------------------------------------------------
def _fuse_kernel(x_ref, w_ref, b_ref, y_ref, stats_ref, *, Ho, Wo, Cin, Cconv):
    C4 = 4 * Cin
    Cout = Cconv + Cin
    xs = x_ref[0].astype(jnp.float32)                        # (Ho, Wo, 4*Cin)

    # Zero halo (top row / left column) built in VMEM -- no HBM padding pass.
    zrow = jnp.zeros((1, Wo, C4), jnp.float32)
    zcol = jnp.zeros((Ho + 1, 1, C4), jnp.float32)
    xp = jnp.concatenate([zrow, xs], axis=0)                 # (Ho+1, Wo,   C4)
    xp = jnp.concatenate([zcol, xp], axis=1)                 # (Ho+1, Wo+1, C4)

    # Unit-shifted space-to-depth patches (order must match weight packing).
    p00 = xp[1:, 1:]        # xs2d[oh  , ow  ]
    p_u = xp[:-1, 1:]       # xs2d[oh-1, ow  ]
    p_l = xp[1:, :-1]       # xs2d[oh  , ow-1]
    p_ul = xp[:-1, :-1]     # xs2d[oh-1, ow-1]

    # Single merged matmul: K = 4 taps * 4*Cin channels (zeros where a tap does
    # not contribute), one MXU push instead of nine K=Cin pushes.
    pcat = jnp.concatenate((p00, p_u, p_l, p_ul), axis=-1)   # (Ho, Wo, 16*Cin)
    conv = jnp.dot(pcat.reshape(Ho * Wo, 4 * C4), w_ref[...],
                   preferred_element_type=jnp.float32)
    conv = conv + b_ref[0]                                   # (Ho*Wo, Cconv)

    # 2x2 max pool == max over the 4 s2d channel groups (pure VPU, contiguous).
    pool = jnp.maximum(
        jnp.maximum(xs[:, :, 0 * Cin:1 * Cin], xs[:, :, 1 * Cin:2 * Cin]),
        jnp.maximum(xs[:, :, 2 * Cin:3 * Cin], xs[:, :, 3 * Cin:4 * Cin]))
    pool = pool.reshape(Ho * Wo, Cin)

    y = jnp.concatenate([conv, pool], axis=1)                # (Ho*Wo, Cout) f32

    # Per-batch-element partial BN statistics (reduced in plain JAX afterwards,
    # keeping the grid axis "parallel"/megacore-shardable).
    stats_ref[0, 0:1, :] = jnp.sum(y, axis=0, keepdims=True)
    stats_ref[0, 1:2, :] = jnp.sum(y * y, axis=0, keepdims=True)

    # Intermediate in bf16 to halve its HBM traffic.
    y_ref[0] = y.reshape(Ho, Wo, Cout).astype(y_ref.dtype)


# ----------------------------------------------------------------------------
# Pass 2: streamed per-channel affine (folded BN) + ReLU, tiled over (N, Ho).
# ----------------------------------------------------------------------------
def _affine_relu_kernel(y_ref, sc_ref, sh_ref, o_ref):
    y = y_ref[...].astype(jnp.float32)                       # (1, TH, Wo, Cout)
    o_ref[...] = jnp.maximum(y * sc_ref[0] + sh_ref[0], 0.0).astype(o_ref.dtype)


# ----------------------------------------------------------------------------
# Wrapper
# ----------------------------------------------------------------------------
def downsampler_block(x_nchw, w_oihw, bias, gamma, beta, *, eps=1e-3):
    N, Cin, H, W = x_nchw.shape
    Cconv = w_oihw.shape[0]
    Cout = Cconv + Cin
    assert H % 2 == 0 and W % 2 == 0, "fused stride-2 conv/pool requires even H and W"
    Ho, Wo = H // 2, W // 2
    C4 = 4 * Cin

    # --- single layout pass: NCHW -> space-to-depth NHWC (N, Ho, Wo, 4*Cin) ---
    x = x_nchw.astype(jnp.float32)
    xs2d = (x.reshape(N, Cin, Ho, 2, Wo, 2)
             .transpose(0, 2, 4, 3, 5, 1)
             .reshape(N, Ho, Wo, C4))

    # --- merge the 9 conv taps into one (4*4*Cin, Cconv) matrix (trace-time) ---
    # conv tap kh (or kw): 0 -> (s2d shift -1, dy=1), 1 -> (0, 0), 2 -> (0, 1)
    w_hwio = jnp.transpose(w_oihw, (2, 3, 1, 0)).astype(jnp.float32)   # (3,3,Cin,Cconv)

    def _split(k):
        return (-1, 1) if k == 0 else ((0, 0) if k == 1 else (0, 1))

    tap_id = {(0, 0): 0, (-1, 0): 1, (0, -1): 2, (-1, -1): 3}   # [p00, p_u, p_l, p_ul]
    wt = jnp.zeros((4, 2, 2, Cin, Cconv), jnp.float32)          # [tap, dy, dx, cin, cout]
    for kh in range(3):
        doh, dy = _split(kh)
        for kw in range(3):
            dow, dx = _split(kw)
            wt = wt.at[tap_id[(doh, dow)], dy, dx].set(w_hwio[kh, kw])
    wt = wt.reshape(4 * C4, Cconv)
    b2 = bias.reshape(1, Cconv).astype(jnp.float32)

    # --- pass 1: conv + pool + concat + partial BN stats, one batch elem/step --
    y, stats = pl.pallas_call(
        functools.partial(_fuse_kernel, Ho=Ho, Wo=Wo, Cin=Cin, Cconv=Cconv),
        out_shape=(
            jax.ShapeDtypeStruct((N, Ho, Wo, Cout), jnp.bfloat16),   # intermediate
            jax.ShapeDtypeStruct((N, 2, Cout), jnp.float32),         # per-batch sum / sumsq
        ),
        grid=(N,),
        in_specs=[
            pl.BlockSpec((1, Ho, Wo, C4), lambda n: (n, 0, 0, 0)),
            pl.BlockSpec((4 * C4, Cconv), lambda n: (0, 0)),
            pl.BlockSpec((1, Cconv), lambda n: (0, 0)),
        ],
        out_specs=(
            pl.BlockSpec((1, Ho, Wo, Cout), lambda n: (n, 0, 0, 0)),
            pl.BlockSpec((1, 2, Cout), lambda n: (n, 0, 0)),
        ),
        compiler_params=pltpu.CompilerParams(dimension_semantics=("parallel",)),
    )(xs2d, wt, b2)

    # --- fold BN (batch stats, biased variance) into a per-channel affine ------
    count = N * Ho * Wo
    mean = stats[:, 0, :].sum(axis=0) / count
    var = jnp.maximum(stats[:, 1, :].sum(axis=0) / count - mean * mean, 0.0)
    scale = gamma.astype(jnp.float32) * jax.lax.rsqrt(var + eps)
    shift = beta.astype(jnp.float32) - mean * scale
    sc2 = scale.reshape(1, Cout)
    sh2 = shift.reshape(1, Cout)

    # --- pass 2: tiled, pipelined affine + ReLU --------------------------------
    TH = Ho
    for cand in (512, 256, 128, 64, 32, 16, 8):
        if Ho % cand == 0:
            TH = cand
            break
    out_nhwc = pl.pallas_call(
        _affine_relu_kernel,
        out_shape=jax.ShapeDtypeStruct((N, Ho, Wo, Cout), jnp.float32),
        grid=(N, Ho // TH),
        in_specs=[
            pl.BlockSpec((1, TH, Wo, Cout), lambda n, h: (n, h, 0, 0)),
            pl.BlockSpec((1, Cout), lambda n, h: (0, 0)),
            pl.BlockSpec((1, Cout), lambda n, h: (0, 0)),
        ],
        out_specs=pl.BlockSpec((1, TH, Wo, Cout), lambda n, h: (n, h, 0, 0)),
        compiler_params=pltpu.CompilerParams(
            dimension_semantics=("parallel", "parallel")),
    )(y, sc2, sh2)

    # back to PyTorch's NCHW
    return jnp.transpose(out_nhwc, (0, 3, 1, 2))


# ----------------------------------------------------------------------------
# Pure-JAX reference for verification
# ----------------------------------------------------------------------------
def _reference(x, w, b, gamma, beta, eps=1e-3):
    conv = jax.lax.conv_general_dilated(
        x, w, window_strides=(2, 2), padding=((1, 1), (1, 1)),
        dimension_numbers=("NCHW", "OIHW", "NCHW"))
    conv = conv + b[None, :, None, None]
    pool = jax.lax.reduce_window(x, -jnp.inf, jax.lax.max,
                                 (1, 1, 2, 2), (1, 1, 2, 2), "VALID")
    y = jnp.concatenate([conv, pool], axis=1)
    mean = jnp.mean(y, axis=(0, 2, 3), keepdims=True)
    var = jnp.mean((y - mean) ** 2, axis=(0, 2, 3), keepdims=True)
    out = (y - mean) / jnp.sqrt(var + eps) * gamma[None, :, None, None] + beta[None, :, None, None]
    return jnp.maximum(out, 0.0)


if __name__ == "__main__":
    # Small, module-consistent shapes: N=2, ninput=4, noutput=8, 16x16 spatial.
    N, Cin, H, W = 2, 4, 16, 16
    noutput = 8
    Cconv = noutput - Cin

    key = jax.random.PRNGKey(0)
    kx, kw, kb, kg, kbe = jax.random.split(key, 5)
    x = jax.random.normal(kx, (N, Cin, H, W), jnp.float32)
    w = jax.random.normal(kw, (Cconv, Cin, 3, 3), jnp.float32) * 0.1   # OIHW (PyTorch)
    bias = jax.random.normal(kb, (Cconv,), jnp.float32) * 0.1
    gamma = 1.0 + 0.1 * jax.random.normal(kg, (noutput,), jnp.float32)
    beta = 0.1 * jax.random.normal(kbe, (noutput,), jnp.float32)

    out = jax.block_until_ready(downsampler_block(x, w, bias, gamma, beta, eps=1e-3))
    ref = jax.block_until_ready(_reference(x, w, bias, gamma, beta, eps=1e-3))

    assert out.shape == (N, noutput, H // 2, W // 2), out.shape
    # bf16 intermediate -> tolerance looser than a pure-f32 pipeline.
    err = float(jnp.max(jnp.abs(out - ref)))
    assert jnp.allclose(out, ref, atol=2e-2, rtol=2e-2), err

    print("KERNEL_OK")
</pallas_src>

<mosaic_0001>
module attributes {stable_mosaic.version = 11 : i64} {
  func.func @_fuse_kernel(%arg0: i32, %arg1: memref<1x8x8x16xf32, #tpu.memory_space<vmem>>, %arg2: memref<64x4xf32, #tpu.memory_space<vmem>>, %arg3: memref<1x4xf32, #tpu.memory_space<vmem>>, %arg4: memref<1x8x8x8xbf16, #tpu.memory_space<vmem>>, %arg5: memref<1x2x8xf32, #tpu.memory_space<vmem>>) attributes {dimension_semantics = [#tpu.dimension_semantics<parallel>], iteration_bounds = array<i64: 2>, scalar_prefetch = 0 : i64, scratch_operands = 0 : i64, tpu.core_type = #tpu.core_type<tc>, window_params = [{transform_indices = @transform_0, window_bounds = array<i64: 1, 8, 8, 16>}, {pipeline_mode = #tpu.pipeline_mode<synchronous>, transform_indices = @transform_1, window_bounds = array<i64: 64, 4>}, {pipeline_mode = #tpu.pipeline_mode<synchronous>, transform_indices = @transform_2, window_bounds = array<i64: 1, 4>}, {transform_indices = @transform_3, window_bounds = array<i64: 1, 8, 8, 8>}, {transform_indices = @transform_4, window_bounds = array<i64: 1, 2, 8>}]} {
    %c0 = arith.constant 0 : index
    %c0_0 = arith.constant 0 : index
    %c0_1 = arith.constant 0 : index
    %c0_2 = arith.constant 0 : index
    %0 = vector.load %arg1[%c0, %c0_0, %c0_1, %c0_2] : memref<1x8x8x16xf32, #tpu.memory_space<vmem>>, vector<1x8x8x16xf32>
    %1 = vector.shape_cast %0 : vector<1x8x8x16xf32> to vector<8x8x16xf32>
    %cst = arith.constant 0.000000e+00 : f32
    %2 = vector.broadcast %cst : f32 to vector<1x8x16xf32>
    %cst_3 = arith.constant 0.000000e+00 : f32
    %3 = vector.broadcast %cst_3 : f32 to vector<9x1x16xf32>
    %4 = tpu.concatenate %2, %1 in 0 : vector<1x8x16xf32>, vector<8x8x16xf32> -> vector<9x8x16xf32>
    %5 = tpu.concatenate %3, %4 in 1 : vector<9x1x16xf32>, vector<9x8x16xf32> -> vector<9x9x16xf32>
    %6 = vector.extract_strided_slice %5 {offsets = [1, 1, 0], sizes = [8, 8, 16], strides = [1, 1, 1]} : vector<9x9x16xf32> to vector<8x8x16xf32>
    %7 = vector.extract_strided_slice %5 {offsets = [0, 1, 0], sizes = [8, 8, 16], strides = [1, 1, 1]} : vector<9x9x16xf32> to vector<8x8x16xf32>
    %8 = vector.extract_strided_slice %5 {offsets = [1, 0, 0], sizes = [8, 8, 16], strides = [1, 1, 1]} : vector<9x9x16xf32> to vector<8x8x16xf32>
    %9 = vector.extract_strided_slice %5 {offsets = [0, 0, 0], sizes = [8, 8, 16], strides = [1, 1, 1]} : vector<9x9x16xf32> to vector<8x8x16xf32>
    %10 = tpu.concatenate %6, %7, %8, %9 in 2 : vector<8x8x16xf32>, vector<8x8x16xf32>, vector<8x8x16xf32>, vector<8x8x16xf32> -> vector<8x8x64xf32>
    %11 = vector.shape_cast %10 : vector<8x8x64xf32> to vector<64x64xf32>
    %c0_4 = arith.constant 0 : index
    %c0_5 = arith.constant 0 : index
    %12 = vector.load %arg2[%c0_4, %c0_5] : memref<64x4xf32, #tpu.memory_space<vmem>>, vector<64x4xf32>
    %cst_6 = arith.constant dense<0.000000e+00> : vector<64x4xf32>
    %13 = tpu.matmul %11, %12, %cst_6 {dimension_numbers = #tpu.dot_dimension_numbers<[1], [0], [0], [1], [0, 0, 1, 1], [], []>} : vector<64x64xf32>, vector<64x4xf32>, vector<64x4xf32> -> vector<64x4xf32>
    %c0_7 = arith.constant 0 : index
    %c0_8 = arith.constant 0 : index
    %14 = vector.load %arg3[%c0_7, %c0_8] : memref<1x4xf32, #tpu.memory_space<vmem>>, vector<1x4xf32>
    %15 = vector.shape_cast %14 : vector<1x4xf32> to vector<4xf32>
    %16 = vector.shape_cast %15 : vector<4xf32> to vector<1x4xf32>
    %17 = vector.broadcast %16 : vector<1x4xf32> to vector<64x4xf32>
    %18 = arith.addf %13, %17 : vector<64x4xf32>
    %19 = vector.extract_strided_slice %1 {offsets = [0, 0, 0], sizes = [8, 8, 4], strides = [1, 1, 1]} : vector<8x8x16xf32> to vector<8x8x4xf32>
    %20 = vector.extract_strided_slice %1 {offsets = [0, 0, 4], sizes = [8, 8, 4], strides = [1, 1, 1]} : vector<8x8x16xf32> to vector<8x8x4xf32>
    %21 = arith.maximumf %19, %20 : vector<8x8x4xf32>
    %22 = vector.extract_strided_slice %1 {offsets = [0, 0, 8], sizes = [8, 8, 4], strides = [1, 1, 1]} : vector<8x8x16xf32> to vector<8x8x4xf32>
    %23 = vector.extract_strided_slice %1 {offsets = [0, 0, 12], sizes = [8, 8, 4], strides = [1, 1, 1]} : vector<8x8x16xf32> to vector<8x8x4xf32>
    %24 = arith.maximumf %22, %23 : vector<8x8x4xf32>
    %25 = arith.maximumf %21, %24 : vector<8x8x4xf32>
    %26 = vector.shape_cast %25 : vector<8x8x4xf32> to vector<64x4xf32>
    %27 = tpu.concatenate %18, %26 in 1 : vector<64x4xf32>, vector<64x4xf32> -> vector<64x8xf32>
    %cst_9 = arith.constant dense<0.000000e+00> : vector<8xf32>
    %28 = vector.multi_reduction <add>, %27, %cst_9 [0] : vector<64x8xf32> to vector<8xf32>
    %29 = vector.shape_cast %28 : vector<8xf32> to vector<1x8xf32>
    %c0_10 = arith.constant 0 : index
    %c0_11 = arith.constant 0 : index
    %c0_12 = arith.constant 0 : index
    %30 = vector.load %arg5[%c0_10, %c0_11, %c0_12] : memref<1x2x8xf32, #tpu.memory_space<vmem>>, vector<1x1x8xf32>
    %31 = vector.shape_cast %30 : vector<1x1x8xf32> to vector<1x8xf32>
    %32 = vector.shape_cast %29 : vector<1x8xf32> to vector<1x1x8xf32>
    tpu.vector_store %arg5[%c0_10, %c0_11, %c0_12], %32 {strides = array<i32>} : memref<1x2x8xf32, #tpu.memory_space<vmem>>, vector<1x1x8xf32>,
    %33 = arith.mulf %27, %27 : vector<64x8xf32>
    %cst_13 = arith.constant dense<0.000000e+00> : vector<8xf32>
    %34 = vector.multi_reduction <add>, %33, %cst_13 [0] : vector<64x8xf32> to vector<8xf32>
    %35 = vector.shape_cast %34 : vector<8xf32> to vector<1x8xf32>
    %c0_14 = arith.constant 0 : index
    %c1 = arith.constant 1 : index
    %c0_15 = arith.constant 0 : index
    %36 = vector.load %arg5[%c0_14, %c1, %c0_15] : memref<1x2x8xf32, #tpu.memory_space<vmem>>, vector<1x1x8xf32>
    %37 = vector.shape_cast %36 : vector<1x1x8xf32> to vector<1x8xf32>
    %38 = vector.shape_cast %35 : vector<1x8xf32> to vector<1x1x8xf32>
    tpu.vector_store %arg5[%c0_14, %c1, %c0_15], %38 {strides = array<i32>} : memref<1x2x8xf32, #tpu.memory_space<vmem>>, vector<1x1x8xf32>,
    %39 = vector.shape_cast %27 : vector<64x8xf32> to vector<8x8x8xf32>
    %40 = arith.truncf %39 : vector<8x8x8xf32> to vector<8x8x8xbf16>
    %c0_16 = arith.constant 0 : index
    %c0_17 = arith.constant 0 : index
    %c0_18 = arith.constant 0 : index
    %c0_19 = arith.constant 0 : index
    %41 = vector.load %arg4[%c0_16, %c0_17, %c0_18, %c0_19] : memref<1x8x8x8xbf16, #tpu.memory_space<vmem>>, vector<1x8x8x8xbf16>
    %42 = vector.shape_cast %41 : vector<1x8x8x8xbf16> to vector<8x8x8xbf16>
    %43 = vector.shape_cast %40 : vector<8x8x8xbf16> to vector<1x8x8x8xbf16>
    tpu.vector_store %arg4[%c0_16, %c0_17, %c0_18, %c0_19], %43 {strides = array<i32>} : memref<1x8x8x8xbf16, #tpu.memory_space<vmem>>, vector<1x8x8x8xbf16>,
    return
  }
  func.func @transform_0(%arg0: i32) -> (i32, i32, i32, i32) {
    %c0_i32 = arith.constant 0 : i32
    %c0_i32_0 = arith.constant 0 : i32
    %c0_i32_1 = arith.constant 0 : i32
    %c0_i32_2 = arith.constant 0 : i32
    return %arg0, %c0_i32, %c0_i32_0, %c0_i32_1 : i32, i32, i32, i32
  }
  func.func @transform_1(%arg0: i32) -> (i32, i32) {
    %c0_i32 = arith.constant 0 : i32
    %c0_i32_0 = arith.constant 0 : i32
    %c0_i32_1 = arith.constant 0 : i32
    return %c0_i32, %c0_i32_0 : i32, i32
  }
  func.func @transform_2(%arg0: i32) -> (i32, i32) {
    %c0_i32 = arith.constant 0 : i32
    %c0_i32_0 = arith.constant 0 : i32
    %c0_i32_1 = arith.constant 0 : i32
    return %c0_i32, %c0_i32_0 : i32, i32
  }
  func.func @transform_3(%arg0: i32) -> (i32, i32, i32, i32) {
    %c0_i32 = arith.constant 0 : i32
    %c0_i32_0 = arith.constant 0 : i32
    %c0_i32_1 = arith.constant 0 : i32
    %c0_i32_2 = arith.constant 0 : i32
    return %arg0, %c0_i32, %c0_i32_0, %c0_i32_1 : i32, i32, i32, i32
  }
  func.func @transform_4(%arg0: i32) -> (i32, i32, i32) {
    %c0_i32 = arith.constant 0 : i32
    %c0_i32_0 = arith.constant 0 : i32
    %c0_i32_1 = arith.constant 0 : i32
    return %arg0, %c0_i32, %c0_i32_0 : i32, i32, i32
  }
}

</mosaic_0001>

<llo_original>
// kernel: tpu_custom_call.1
$region0: #{tpu_custom_call.1}
  #allocation0 [shape = 'u32[]', space=smem, size = 0x4, offset = 0x4, fixed_abs, tag = 'smem constant byte address 0x4 - core index']
  #allocation1 [shape = 'u32[72,128]{1,0:T(1,128)}', space=vmem, size = 0x9000, scoped, tag = 'internal scratch']
  %s0 = inlined_call_operand.hbm [shape: f32[2,8,8,16], index: 0, kind: input, shape index: {}]
  %s1 = inlined_call_operand.vmem [shape: f32[64,4], index: 1, kind: input, shape index: {}]
  %s2 = inlined_call_operand.vmem [shape: f32[1,4], index: 2, kind: input, shape index: {}]
  %s3 = inlined_call_operand.hbm [shape: bf16[2,8,8,8], index: 3, kind: output, shape index: {0}]
  %s4 = inlined_call_operand.hbm [shape: f32[2,2,8], index: 4, kind: output, shape index: {1}]
  %5 = xla_tuple %s3, %s4
  %s6 = sld [smem:[#allocation0]]
  $region57: #{tpu_custom_call.1} parent=0
    _
  %s8 = ssub.s32 1, %s6
  %s9 = scalar_select 0, %s8, %s6
  $region1: #{tpu_custom_call.1} parent=0
    #allocation2 [shape = 'u8[65536]{0}', space=vmem, size = 0x10000, scoped, tag = 'input window, operand 0']
    #allocation3 [shape = 's32[2]{0}', space=sflag, size = 0x8, scoped, tag = 'scoped memory for tpu_custom_call.1']
    #allocation4 [shape = 's32[2]{0}', space=sflag, size = 0x8, scoped, tag = 'scoped memory for tpu_custom_call.1']
    #allocation5 [shape = 'u8[32768]{0}', space=vmem, size = 0x8000, scoped, tag = 'output window, operand 0']
    #allocation6 [shape = 'u8[2048]{0}', space=vmem, size = 0x800, scoped, tag = 'output window, operand 1']
    #allocation7 [shape = 's32[2]{0}', space=sflag, size = 0x8, scoped, tag = 'scoped memory for tpu_custom_call.1']
    %10 = vsyncpa [#allocation3], 0
    %s11 = scalar_lea.sflag [#allocation3], 1
    %12 = vsyncpa %s11, 0
    %13 = vsyncpa [#allocation4], 0
    %s14 = scalar_lea.sflag [#allocation4], 1
    %15 = vsyncpa %s14, 0
    %16 = vsyncpa [#allocation7], 0
    %s17 = scalar_lea.sflag [#allocation7], 1
    %18 = vsyncpa %s17, 0
    loop: start=0, step=1, limit=4
    $region2: #{tpu_custom_call.1} parent=1 // loop_pre_header
      _
    $region3: #{tpu_custom_call.1} parent=1 // loop_header
      %s20 = sphi 0, %s24
      %p21 = scmp.ge.s32.totalorder %s20, 4
      %s30 = sphi 0, %s32
      %s33 = sphi 0, %s30
      %s34 = sphi 0, %s33
      %s50 = sphi 0, %s34
      %s54 = sphi 0, %s54
      %s56 = sphi 0, %s54
      %s57 = sphi 0, %s56
      %s71 = sphi 0, %s57
      %s75 = sphi 0, %s75
      %s77 = sphi 0, %s75
      %s78 = sphi 0, %s77
      %s92 = sphi 0, %s78
      %s98 = sphi 0, %s100
      %s101 = sphi 0, %s98
      %s102 = sphi 0, %s101
      %s118 = sphi 0, %s102
      %s124 = sphi 0, %s126
      %s127 = sphi 0, %s124
      %s128 = sphi 0, %s127
      %s144 = sphi 0, %s128
    $region4: #{tpu_custom_call.1} parent=1 // loop_header_branch
      %23 = sbr.rel (%p21) target = $region8
    $region5: #{tpu_custom_call.1} parent=1 // loop_body
      %s25 = ssub.s32 %s20, 1
      %s26 = ssub.s32 %s20, 2
      %s27 = sadd.s32 %s20, 1
      %s28 = ssub.s32 %s20, %s27
      %p29 = scmp.eq.s32.totalorder %s28, 0
      %s31 = sadd.s32 %s30, 1
      %s32 = scalar_select %p29, %s30, %s31
      %p35 = pneg %p29
      %p36 = scmp.eq.s32.totalorder %s20, 1
      %p37 = por %p35, %p36
      %p38 = scmp.ne.s32.totalorder %s30, %s33
      %p39 = scmp.eq.s32.totalorder %s20, 0
      %p40 = por %p38, %p39
      %p41 = scmp.ne.s32.totalorder %s30, %s33
      %p42 = scmp.eq.s32.totalorder %s25, 1
      %p43 = por %p41, %p42
      %p44 = scmp.ne.s32.totalorder %s33, %s34
      %p45 = scmp.eq.s32.totalorder %s25, 0
      %p46 = por %p44, %p45
      %p47 = scmp.ne.s32.totalorder %s33, %s34
      %p48 = scmp.eq.s32.totalorder %s26, 1
      %p49 = por %p47, %p48
      %p51 = scmp.ne.s32.totalorder %s34, %s50
      %p52 = scmp.eq.s32.totalorder %s26, 0
      %p53 = por %p51, %p52
      %s55 = sadd.s32 %s54, 1
      %p58 = scmp.eq.s32.totalorder %s20, 1
      %p59 = scmp.ne.s32.totalorder %s54, %s56
      %p60 = scmp.eq.s32.totalorder %s20, 0
      %p61 = por %p59, %p60
      %p62 = scmp.ne.s32.totalorder %s54, %s56
      %p63 = scmp.eq.s32.totalorder %s25, 1
      %p64 = por %p62, %p63
      %p65 = scmp.ne.s32.totalorder %s56, %s57
      %p66 = scmp.eq.s32.totalorder %s25, 0
      %p67 = por %p65, %p66
      %p68 = scmp.ne.s32.totalorder %s56, %s57
      %p69 = scmp.eq.s32.totalorder %s26, 1
      %p70 = por %p68, %p69
      %p72 = scmp.ne.s32.totalorder %s57, %s71
      %p73 = scmp.eq.s32.totalorder %s26, 0
      %p74 = por %p72, %p73
      %s76 = sadd.s32 %s75, 1
      %p79 = scmp.eq.s32.totalorder %s20, 1
      %p80 = scmp.ne.s32.totalorder %s75, %s77
      %p81 = scmp.eq.s32.totalorder %s20, 0
      %p82 = por %p80, %p81
      %p83 = scmp.ne.s32.totalorder %s75, %s77
      %p84 = scmp.eq.s32.totalorder %s25, 1
      %p85 = por %p83, %p84
      %p86 = scmp.ne.s32.totalorder %s77, %s78
      %p87 = scmp.eq.s32.totalorder %s25, 0
      %p88 = por %p86, %p87
      %p89 = scmp.ne.s32.totalorder %s77, %s78
      %p90 = scmp.eq.s32.totalorder %s26, 1
      %p91 = por %p89, %p90
      %p93 = scmp.ne.s32.totalorder %s78, %s92
      %p94 = scmp.eq.s32.totalorder %s26, 0
      %p95 = por %p93, %p94
      %s96 = ssub.s32 %s20, %s27
      %p97 = scmp.eq.s32.totalorder %s96, 0
      %s99 = sadd.s32 %s98, 1
      %s100 = scalar_select %p97, %s98, %s99
      %p103 = pneg %p97
      %p104 = scmp.eq.s32.totalorder %s20, 1
      %p105 = por %p103, %p104
      %p106 = scmp.ne.s32.totalorder %s98, %s101
      %p107 = scmp.eq.s32.totalorder %s20, 0
      %p108 = por %p106, %p107
      %p109 = scmp.ne.s32.totalorder %s98, %s101
      %p110 = scmp.eq.s32.totalorder %s25, 1
      %p111 = por %p109, %p110
      %p112 = scmp.ne.s32.totalorder %s101, %s102
      %p113 = scmp.eq.s32.totalorder %s25, 0
      %p114 = por %p112, %p113
      %p115 = scmp.ne.s32.totalorder %s101, %s102
      %p116 = scmp.eq.s32.totalorder %s26, 1
      %p117 = por %p115, %p116
      %p119 = scmp.ne.s32.totalorder %s102, %s118
      %p120 = scmp.eq.s32.totalorder %s26, 0
      %p121 = por %p119, %p120
      %s122 = ssub.s32 %s20, %s27
      %p123 = scmp.eq.s32.totalorder %s122, 0
      %s125 = sadd.s32 %s124, 1
      %s126 = scalar_select %p123, %s124, %s125
      %p129 = pneg %p123
      %p130 = scmp.eq.s32.totalorder %s20, 1
      %p131 = por %p129, %p130
      %p132 = scmp.ne.s32.totalorder %s124, %s127
      %p133 = scmp.eq.s32.totalorder %s20, 0
      %p134 = por %p132, %p133
      %p135 = scmp.ne.s32.totalorder %s124, %s127
      %p136 = scmp.eq.s32.totalorder %s25, 1
      %p137 = por %p135, %p136
      %p138 = scmp.ne.s32.totalorder %s127, %s128
      %p139 = scmp.eq.s32.totalorder %s25, 0
      %p140 = por %p138, %p139
      %p141 = scmp.ne.s32.totalorder %s127, %s128
      %p142 = scmp.eq.s32.totalorder %s26, 1
      %p143 = por %p141, %p142
      %p145 = scmp.ne.s32.totalorder %s128, %s144
      %p146 = scmp.eq.s32.totalorder %s26, 0
      %p147 = por %p145, %p146
      %p148 = scmp.le.s32.totalorder 1, %s20
      %p149 = scmp.lt.s32.totalorder %s20, 3
      %p150 = pnand %p148, %p149
      %p151 = pneg %p150
      // Predicated region
      $region9: #{tpu_custom_call.1} parent=5 // pred_check
        _
      $region10: #{tpu_custom_call.1} parent=5 // pred_check_branch
        %153 = sbr.rel (%p150) target = $region12
      $region11: #{tpu_custom_call.1} parent=5 // pred_region
        %s154 = ssub.s32 %s20, 1
        // Predicated region
        $region13: #{tpu_custom_call.1} parent=11 // pred_check
          %p155 = pneg %p67
        $region14: #{tpu_custom_call.1} parent=11 // pred_check_branch
          %157 = sbr.rel (%p155) target = $region16
        $region15: #{tpu_custom_call.1} parent=11 // pred_region
          _
        $region16: #{tpu_custom_call.1} parent=11 // pred_fallthru
          _
        // Predicated region
        $region17: #{tpu_custom_call.1} parent=11 // pred_check
          %p158 = pneg %p88
        $region18: #{tpu_custom_call.1} parent=11 // pred_check_branch
          %160 = sbr.rel (%p158) target = $region20
        $region19: #{tpu_custom_call.1} parent=11 // pred_region
          _
        $region20: #{tpu_custom_call.1} parent=11 // pred_fallthru
          _
      $region12: #{tpu_custom_call.1} parent=5 // pred_fallthru
        _
      %p161 = scmp.lt.s32.totalorder %s20, 2
      // Predicated region
      $region21: #{tpu_custom_call.1} parent=5 // pred_check
        %p162 = pneg %p161
      $region22: #{tpu_custom_call.1} parent=5 // pred_check_branch
        %164 = sbr.rel (%p162) target = $region24
      $region23: #{tpu_custom_call.1} parent=5 // pred_region
        // Predicated region
        $region25: #{tpu_custom_call.1} parent=23 // pred_check
          %p165 = pneg %p40
        $region26: #{tpu_custom_call.1} parent=23 // pred_check_branch
          %167 = sbr.rel (%p165) target = $region28
        $region27: #{tpu_custom_call.1} parent=23 // pred_region
          %s168 = sand.u32 %s30, 1
          %s169 = scalar_lea.sflag [#allocation3], %s168
          %s170 = sand.u32 %s30, 1
          %s171 = smul.addr %s170, 64
          %s172 = scalar_lea.vmem [#allocation2], %s171
          %174 = vsyncadd %s169, 0
          %s175 = smul.addr %s20, 8
          %s176 = smul.addr %s175, 8
          %s177 = scalar_lea.hbm %s0, %s176
          %s178 = sshll.u32 %s177, 4
          %s179 = int_to_ptr.hbm [resolvable:$true] %s178
          %s180 = sshll.u32 %s172, 4
          %s181 = int_to_ptr.vmem [resolvable:$true] %s180
          %186 = dma.hbm_to_vmem [thread:$0]  %s179, 1024, %s181, %s169, 128, 128, 8
        $region28: #{tpu_custom_call.1} parent=23 // pred_fallthru
          _
      $region24: #{tpu_custom_call.1} parent=5 // pred_fallthru
        _
      %p187 = scmp.le.s32.totalorder 1, %s20
      %p188 = scmp.lt.s32.totalorder %s20, 3
      %p189 = pnand %p187, %p188
      %p190 = pneg %p189
      // Predicated region
      $region29: #{tpu_custom_call.1} parent=5 // pred_check
        _
      $region30: #{tpu_custom_call.1} parent=5 // pred_check_branch
        %192 = sbr.rel (%p189) target = $region32
      $region31: #{tpu_custom_call.1} parent=5 // pred_region
        %s193 = ssub.s32 %s20, 1
        %s194 = sand.u32 %s33, 1
        %s195 = scalar_lea.sflag [#allocation3], %s194
        %s196 = sand.u32 %s33, 1
        %s197 = smul.addr %s196, 64
        %s198 = scalar_lea.vmem [#allocation2], %s197
        // Predicated region
        $region33: #{tpu_custom_call.1} parent=31 // pred_check
          %p199 = pneg %p46
        $region34: #{tpu_custom_call.1} parent=31 // pred_check_branch
          %201 = sbr.rel (%p199) target = $region36
        $region35: #{tpu_custom_call.1} parent=31 // pred_region
          %203 = dma.done %s195, 1024
        $region36: #{tpu_custom_call.1} parent=31 // pred_fallthru
          _
        %s204 = sand.u32 %s33, 1
        %s205 = scalar_lea.sflag [#allocation3], %s204
        %s206 = sand.u32 %s33, 1
        %s207 = smul.addr %s206, 64
        %s208 = scalar_lea.vmem [#allocation2], %s207
        %p209 = pneg %p46
        %p210 = pneg %p43
        %p211 = pneg %p67
        %p212 = pneg %p64
        %p213 = pneg %p88
        %p214 = pneg %p85
        %p215 = pneg %p114
        %p216 = pneg %p111
        %s217 = sand.u32 %s101, 1
        %s218 = scalar_lea.sflag [#allocation4], %s217
        %s219 = sand.u32 %s101, 1
        %s220 = smul.addr %s219, 32
        %s221 = scalar_lea.vmem [#allocation5], %s220
        %p222 = pneg %p140
        %p223 = pneg %p137
        %s224 = sand.u32 %s127, 1
        %s225 = scalar_lea.sflag [#allocation7], %s224
        %s226 = sand.u32 %s127, 1
        %s227 = smul.addr %s226, 2
        %s228 = scalar_lea.vmem [#allocation6], %s227
        %v229 = vld [vmem:[%s198] sm:$0xff]
        %v230 = vld [vmem:[%s198 + $0x8] sm:$0xff]
        %v231 = vld [vmem:[%s198 + $0x10] sm:$0xff]
        %v232 = vld [vmem:[%s198 + $0x18] sm:$0xff]
        %v233 = vld [vmem:[%s198 + $0x20] sm:$0xff]
        %v234 = vld [vmem:[%s198 + $0x28] sm:$0xff]
        %v235 = vld [vmem:[%s198 + $0x30] sm:$0xff]
        %v236 = vld [vmem:[%s198 + $0x38] sm:$0xff]
        %v246 = vrot.slane 0.0, 7
        %v247 = vrot.slane %v229, 7
        %v248 = vrot.slane %v230, 7
        %v249 = vrot.slane %v231, 7
        %v250 = vrot.slane %v232, 7
        %v251 = vrot.slane %v233, 7
        %v252 = vrot.slane %v234, 7
        %v253 = vrot.slane %v235, 7
        %v254 = vrot.slane %v236, 7
        %vm264 = vcmask 1040384
        %v265 = vsel %vm264, 0.0, %v246
        %v266 = vsel %vm264, 0.0, %v247
        %v267 = vsel %vm264, 0.0, %v248
        %v268 = vsel %vm264, 0.0, %v249
        %v269 = vsel %vm264, 0.0, %v250
        %v270 = vsel %vm264, 0.0, %v251
        %v271 = vsel %vm264, 0.0, %v252
        %v272 = vsel %vm264, 0.0, %v253
        %v273 = vsel %vm264, 0.0, %v254
        %282 = vrot.lane.b32.xlu0 %v265, 16
        %v283 = vpop.permute.xlu0 %282
        %284 = vrot.lane.b32.xlu0 %v246, 16
        %v285 = vpop.permute.xlu0 %284
        %286 = vrot.lane.b32.xlu0 %v266, 16
        %v287 = vpop.permute.xlu0 %286
        %288 = vrot.lane.b32.xlu0 %v247, 16
        %v289 = vpop.permute.xlu0 %288
        %290 = vrot.lane.b32.xlu0 %v267, 16
        %v291 = vpop.permute.xlu0 %290
        %292 = vrot.lane.b32.xlu0 %v248, 16
        %v293 = vpop.permute.xlu0 %292
        %294 = vrot.lane.b32.xlu0 %v268, 16
        %v295 = vpop.permute.xlu0 %294
        %296 = vrot.lane.b32.xlu0 %v249, 16
        %v297 = vpop.permute.xlu0 %296
        %298 = vrot.lane.b32.xlu0 %v269, 16
        %v299 = vpop.permute.xlu0 %298
        %300 = vrot.lane.b32.xlu0 %v250, 16
        %v301 = vpop.permute.xlu0 %300
        %302 = vrot.lane.b32.xlu0 %v270, 16
        %v303 = vpop.permute.xlu0 %302
        %304 = vrot.lane.b32.xlu0 %v251, 16
        %v305 = vpop.permute.xlu0 %304
        %306 = vrot.lane.b32.xlu0 %v271, 16
        %v307 = vpop.permute.xlu0 %306
        %308 = vrot.lane.b32.xlu0 %v252, 16
        %v309 = vpop.permute.xlu0 %308
        %310 = vrot.lane.b32.xlu0 %v272, 16
        %v311 = vpop.permute.xlu0 %310
        %312 = vrot.lane.b32.xlu0 %v253, 16
        %v313 = vpop.permute.xlu0 %312
        %v331 = vrot.slane %v266, 7
        %v332 = vrot.slane %v267, 7
        %v333 = vrot.slane %v268, 7
        %v334 = vrot.slane %v269, 7
        %v335 = vrot.slane %v270, 7
        %v336 = vrot.slane %v271, 7
        %v337 = vrot.slane %v272, 7
        %v338 = vrot.slane %v273, 7
        %339 = vrot.lane.b32.xlu0 %v331, 32
        %v340 = vpop.permute.xlu0 %339
        %341 = vrot.lane.b32.xlu0 %v332, 32
        %v342 = vpop.permute.xlu0 %341
        %343 = vrot.lane.b32.xlu0 %v333, 32
        %v344 = vpop.permute.xlu0 %343
        %345 = vrot.lane.b32.xlu0 %v334, 32
        %v346 = vpop.permute.xlu0 %345
        %347 = vrot.lane.b32.xlu0 %v335, 32
        %v348 = vpop.permute.xlu0 %347
        %349 = vrot.lane.b32.xlu0 %v336, 32
        %v350 = vpop.permute.xlu0 %349
        %351 = vrot.lane.b32.xlu0 %v337, 32
        %v352 = vpop.permute.xlu0 %351
        %353 = vrot.lane.b32.xlu0 %v338, 32
        %v354 = vpop.permute.xlu0 %353
        %v363 = vrot.slane %v265, 7
        %364 = vrot.lane.b32.xlu0 %v363, 48
        %v365 = vpop.permute.xlu0 %364
        %366 = vrot.lane.b32.xlu0 %v331, 48
        %v367 = vpop.permute.xlu0 %366
        %368 = vrot.lane.b32.xlu0 %v332, 48
        %v369 = vpop.permute.xlu0 %368
        %370 = vrot.lane.b32.xlu0 %v333, 48
        %v371 = vpop.permute.xlu0 %370
        %372 = vrot.lane.b32.xlu0 %v334, 48
        %v373 = vpop.permute.xlu0 %372
        %374 = vrot.lane.b32.xlu0 %v335, 48
        %v375 = vpop.permute.xlu0 %374
        %376 = vrot.lane.b32.xlu0 %v336, 48
        %v377 = vpop.permute.xlu0 %376
        %378 = vrot.lane.b32.xlu0 %v337, 48
        %v379 = vpop.permute.xlu0 %378
        %vm388 = vcmask 130048
        %v389 = vsel %vm388, %v266, %v283
        %v390 = vsel %vm388, %v247, %v285
        %v391 = vsel %vm388, %v267, %v287
        %v392 = vsel %vm388, %v248, %v289
        %v393 = vsel %vm388, %v268, %v291
        %v394 = vsel %vm388, %v249, %v293
        %v395 = vsel %vm388, %v269, %v295
        %v396 = vsel %vm388, %v250, %v297
        %v397 = vsel %vm388, %v270, %v299
        %v398 = vsel %vm388, %v251, %v301
        %v399 = vsel %vm388, %v271, %v303
        %v400 = vsel %vm388, %v252, %v305
        %v401 = vsel %vm388, %v272, %v307
        %v402 = vsel %vm388, %v253, %v309
        %v403 = vsel %vm388, %v273, %v311
        %v404 = vsel %vm388, %v254, %v313
        %vm405 = vcmask 261120
        %v406 = vsel %vm405, %v389, %v340
        %v407 = vsel %vm405, %v390, %v340
        %v408 = vsel %vm405, %v391, %v342
        %v409 = vsel %vm405, %v392, %v342
        %v410 = vsel %vm405, %v393, %v344
        %v411 = vsel %vm405, %v394, %v344
        %v412 = vsel %vm405, %v395, %v346
        %v413 = vsel %vm405, %v396, %v346
        %v414 = vsel %vm405, %v397, %v348
        %v415 = vsel %vm405, %v398, %v348
        %v416 = vsel %vm405, %v399, %v350
        %v417 = vsel %vm405, %v400, %v350
        %v418 = vsel %vm405, %v401, %v352
        %v419 = vsel %vm405, %v402, %v352
        %v420 = vsel %vm405, %v403, %v354
        %v421 = vsel %vm405, %v404, %v354
        %vm422 = vcmask 392192
        %v423 = vsel %vm422, %v406, %v365
        %v424 = vsel %vm422, %v407, %v365
        %v425 = vsel %vm422, %v408, %v367
        %v426 = vsel %vm422, %v409, %v367
        %v427 = vsel %vm422, %v410, %v369
        %v428 = vsel %vm422, %v411, %v369
        %v429 = vsel %vm422, %v412, %v371
        %v430 = vsel %vm422, %v413, %v371
        %v431 = vsel %vm422, %v414, %v373
        %v432 = vsel %vm422, %v415, %v373
        %v433 = vsel %vm422, %v416, %v375
        %v434 = vsel %vm422, %v417, %v375
        %v435 = vsel %vm422, %v418, %v377
        %v436 = vsel %vm422, %v419, %v377
        %v437 = vsel %vm422, %v420, %v379
        %v438 = vsel %vm422, %v421, %v379
        %vm455 = vcmask 1046528
        %v456 = vrot.slane %v423, 1
        %v457 = vrot.slane %v424, 1
        %v458 = vsel %vm455, %v456, %v457
        %v459 = vrot.slane %v425, 1
        %v460 = vrot.slane %v426, 1
        %v461 = vsel %vm455, %v459, %v460
        %v462 = vrot.slane %v427, 1
        %v463 = vrot.slane %v428, 1
        %v464 = vsel %vm455, %v462, %v463
        %v465 = vrot.slane %v429, 1
        %v466 = vrot.slane %v430, 1
        %v467 = vsel %vm455, %v465, %v466
        %v468 = vrot.slane %v431, 1
        %v469 = vrot.slane %v432, 1
        %v470 = vsel %vm455, %v468, %v469
        %v471 = vrot.slane %v433, 1
        %v472 = vrot.slane %v434, 1
        %v473 = vsel %vm455, %v471, %v472
        %v474 = vrot.slane %v435, 1
        %v475 = vrot.slane %v436, 1
        %v476 = vsel %vm455, %v474, %v475
        %v477 = vrot.slane %v437, 1
        %v478 = vrot.slane %v438, 1
        %v479 = vsel %vm455, %v477, %v478
        %v480 = vld [vmem:[%s1] sm:$0xff]
        %v481 = vld [vmem:[%s1 + $0x8] sm:$0xff]
        %v482 = vld [vmem:[%s1 + $0x10] sm:$0xff]
        %v483 = vld [vmem:[%s1 + $0x18] sm:$0xff]
        %v484 = vld [vmem:[%s1 + $0x20] sm:$0xff]
        %v485 = vld [vmem:[%s1 + $0x28] sm:$0xff]
        %v486 = vld [vmem:[%s1 + $0x30] sm:$0xff]
        %v487 = vld [vmem:[%s1 + $0x38] sm:$0xff]
        %v488 = vld [vmem:[%s2] sm:$0x1]
        %v490 = vperm.slane %v488, 0
        %vm492 = vcmask 523264
        %v493 = vsel %vm492, %v458, 0
        %v495 = vsel %vm492, %v461, 0
        %v497 = vsel %vm492, %v464, 0
        %v499 = vsel %vm492, %v467, 0
        %v501 = vsel %vm492, %v470, 0
        %v503 = vsel %vm492, %v473, 0
        %v505 = vsel %vm492, %v476, 0
        %v507 = vsel %vm492, %v479, 0
        %509 = vmatpush.msra.mxu0 0.0
        %510 = vmatpush.msra.mxu0 0.0
        %511 = vmatpush.msra.mxu0 0.0
        %512 = vmatpush.msra.mxu0 0.0
        %513 = vmatpush.msra.mxu0 0.0
        %514 = vmatpush.msra.mxu0 0.0
        %515 = vmatpush.msra.mxu0 0.0
        %516 = vmatpush.msra.mxu0 0.0
        %517 = vmatpush.msra.mxu0 %v487
        %518 = vmatpush.msra.mxu0 %v486
        %519 = vmatpush.msra.mxu0 %v485
        %520 = vmatpush.msra.mxu0 %v484
        %521 = vmatpush.msra.mxu0 %v483
        %522 = vmatpush.msra.mxu0 %v482
        %523 = vmatpush.msra.mxu0 %v481
        %524 = vmatpush.msra.mxu0 %v480
        %525 = vmatmul.f32.gmra.mxu0 %v493
        %v526 = vpop.f32.mrf.mxu0
        %v527 = vadd.f32 %v490, %v526
        %528 = vmatmul.f32.gmra.mxu0 %v495
        %v529 = vpop.f32.mrf.mxu0
        %v530 = vadd.f32 %v490, %v529
        %531 = vmatmul.f32.gmra.mxu0 %v497
        %v532 = vpop.f32.mrf.mxu0
        %v533 = vadd.f32 %v490, %v532
        %534 = vmatmul.f32.gmra.mxu0 %v499
        %v535 = vpop.f32.mrf.mxu0
        %v536 = vadd.f32 %v490, %v535
        %537 = vmatmul.f32.gmra.mxu0 %v501
        %v538 = vpop.f32.mrf.mxu0
        %v539 = vadd.f32 %v490, %v538
        %540 = vmatmul.f32.gmra.mxu0 %v503
        %v541 = vpop.f32.mrf.mxu0
        %v542 = vadd.f32 %v490, %v541
        %543 = vmatmul.f32.gmra.mxu0 %v505
        %v544 = vpop.f32.mrf.mxu0
        %v545 = vadd.f32 %v490, %v544
        %546 = vmatmul.f32.gmra.mxu0 %v507
        %v547 = vpop.f32.mrf.mxu0
        %v548 = vadd.f32 %v490, %v547
        %549 = vdwg.mxu0
        %550 = vrot.lane.b32.xlu0 %v229, 124
        %v551 = vpop.permute.xlu0 %550
        %552 = vrot.lane.b32.xlu0 %v230, 124
        %v553 = vpop.permute.xlu0 %552
        %554 = vrot.lane.b32.xlu0 %v231, 124
        %v555 = vpop.permute.xlu0 %554
        %556 = vrot.lane.b32.xlu0 %v232, 124
        %v557 = vpop.permute.xlu0 %556
        %558 = vrot.lane.b32.xlu0 %v233, 124
        %v559 = vpop.permute.xlu0 %558
        %560 = vrot.lane.b32.xlu0 %v234, 124
        %v561 = vpop.permute.xlu0 %560
        %562 = vrot.lane.b32.xlu0 %v235, 124
        %v563 = vpop.permute.xlu0 %562
        %564 = vrot.lane.b32.xlu0 %v236, 124
        %v565 = vpop.permute.xlu0 %564
        %v574 = vmax.f32 %v229, %v551
        %v575 = vmax.f32 %v230, %v553
        %v576 = vmax.f32 %v231, %v555
        %v577 = vmax.f32 %v232, %v557
        %v578 = vmax.f32 %v233, %v559
        %v579 = vmax.f32 %v234, %v561
        %v580 = vmax.f32 %v235, %v563
        %v581 = vmax.f32 %v236, %v565
        %590 = vrot.lane.b32.xlu0 %v574, 120
        %v591 = vpop.permute.xlu0 %590
        %592 = vrot.lane.b32.xlu0 %v575, 120
        %v593 = vpop.permute.xlu0 %592
        %594 = vrot.lane.b32.xlu0 %v576, 120
        %v595 = vpop.permute.xlu0 %594
        %596 = vrot.lane.b32.xlu0 %v577, 120
        %v597 = vpop.permute.xlu0 %596
        %598 = vrot.lane.b32.xlu0 %v578, 120
        %v599 = vpop.permute.xlu0 %598
        %600 = vrot.lane.b32.xlu0 %v579, 120
        %v601 = vpop.permute.xlu0 %600
        %602 = vrot.lane.b32.xlu0 %v580, 120
        %v603 = vpop.permute.xlu0 %602
        %604 = vrot.lane.b32.xlu0 %v581, 120
        %v605 = vpop.permute.xlu0 %604
        %v614 = vmax.f32 %v574, %v591
        %v615 = vmax.f32 %v575, %v593
        %v616 = vmax.f32 %v576, %v595
        %v617 = vmax.f32 %v577, %v597
        %v618 = vmax.f32 %v578, %v599
        %v619 = vmax.f32 %v579, %v601
        %v620 = vmax.f32 %v580, %v603
        %v621 = vmax.f32 %v581, %v605
        %630 = vrot.lane.b32.xlu0 %v614, 4
        %v631 = vpop.permute.xlu0 %630
        %632 = vrot.lane.b32.xlu0 %v615, 4
        %v633 = vpop.permute.xlu0 %632
        %634 = vrot.lane.b32.xlu0 %v616, 4
        %v635 = vpop.permute.xlu0 %634
        %636 = vrot.lane.b32.xlu0 %v617, 4
        %v637 = vpop.permute.xlu0 %636
        %638 = vrot.lane.b32.xlu0 %v618, 4
        %v639 = vpop.permute.xlu0 %638
        %640 = vrot.lane.b32.xlu0 %v619, 4
        %v641 = vpop.permute.xlu0 %640
        %642 = vrot.lane.b32.xlu0 %v620, 4
        %v643 = vpop.permute.xlu0 %642
        %644 = vrot.lane.b32.xlu0 %v621, 4
        %v645 = vpop.permute.xlu0 %644
        %vm654 = vcmask 31744
        %v655 = vsel %vm654, %v527, %v631
        %v656 = vsel %vm654, %v530, %v633
        %v657 = vsel %vm654, %v533, %v635
        %v658 = vsel %vm654, %v536, %v637
        %v659 = vsel %vm654, %v539, %v639
        %v660 = vsel %vm654, %v542, %v641
        %v661 = vsel %vm654, %v545, %v643
        %v662 = vsel %vm654, %v548, %v645
        %vm663 = vcmask 64512
        %v664 = vsel %vm663, %v655, 0.0
        %v665 = vsel %vm663, %v656, 0.0
        %v666 = vadd.f32 %v664, %v665
        %v667 = vsel %vm663, %v657, 0.0
        %v668 = vadd.f32 %v666, %v667
        %v669 = vsel %vm663, %v658, 0.0
        %v670 = vadd.f32 %v668, %v669
        %v671 = vsel %vm663, %v659, 0.0
        %v672 = vadd.f32 %v670, %v671
        %v673 = vsel %vm663, %v660, 0.0
        %v674 = vadd.f32 %v672, %v673
        %v675 = vsel %vm663, %v661, 0.0
        %v676 = vadd.f32 %v674, %v675
        %v677 = vsel %vm663, %v662, 0.0
        %v678 = vadd.f32 %v676, %v677
        %v679 = vrot.slane %v678, 4
        %v680 = vadd.f32 %v678, %v679
        %v681 = vrot.slane %v680, 2
        %v682 = vadd.f32 %v680, %v681
        %v683 = vrot.slane %v682, 1
        %v684 = vadd.f32 %v682, %v683
        %vm685 = vcmask 57344
        %686 = vst.msk [vmem:[%s228] sm:$0x1] %vm685, %v684
        %v687 = vmul.f32 %v655, %v655
        %v688 = vmul.f32 %v656, %v656
        %v689 = vmul.f32 %v657, %v657
        %v690 = vmul.f32 %v658, %v658
        %v691 = vmul.f32 %v659, %v659
        %v692 = vmul.f32 %v660, %v660
        %v693 = vmul.f32 %v661, %v661
        %v694 = vmul.f32 %v662, %v662
        %v695 = vsel %vm663, %v687, 0.0
        %v696 = vsel %vm663, %v688, 0.0
        %v697 = vadd.f32 %v695, %v696
        %v698 = vsel %vm663, %v689, 0.0
        %v699 = vadd.f32 %v697, %v698
        %v700 = vsel %vm663, %v690, 0.0
        %v701 = vadd.f32 %v699, %v700
        %v702 = vsel %vm663, %v691, 0.0
        %v703 = vadd.f32 %v701, %v702
        %v704 = vsel %vm663, %v692, 0.0
        %v705 = vadd.f32 %v703, %v704
        %v706 = vsel %vm663, %v693, 0.0
        %v707 = vadd.f32 %v705, %v706
        %v708 = vsel %vm663, %v694, 0.0
        %v709 = vadd.f32 %v707, %v708
        %v710 = vrot.slane %v709, 4
        %v711 = vadd.f32 %v709, %v710
        %v712 = vrot.slane %v711, 2
        %v713 = vadd.f32 %v711, %v712
        %v714 = vrot.slane %v713, 1
        %v715 = vadd.f32 %v713, %v714
        %716 = vst.msk [vmem:[%s228 + $0x1] sm:$0x1] %vm685, %v715
        %v717 = vpack.c.bf16 %v655, %v655
        %v718 = vpack.c.bf16 %v656, %v656
        %v719 = vpack.c.bf16 %v657, %v657
        %v720 = vpack.c.bf16 %v658, %v658
        %v721 = vpack.c.bf16 %v659, %v659
        %v722 = vpack.c.bf16 %v660, %v660
        %v723 = vpack.c.bf16 %v661, %v661
        %v724 = vpack.c.bf16 %v662, %v662
        %vm725 = vcmask 60416
        %726 = vst.msk [vmem:[%s221] sm:$0xf] %vm725, %v717
        %727 = vst.msk [vmem:[%s221 + $0x4] sm:$0xf] %vm725, %v718
        %728 = vst.msk [vmem:[%s221 + $0x8] sm:$0xf] %vm725, %v719
        %729 = vst.msk [vmem:[%s221 + $0xc] sm:$0xf] %vm725, %v720
        %730 = vst.msk [vmem:[%s221 + $0x10] sm:$0xf] %vm725, %v721
        %731 = vst.msk [vmem:[%s221 + $0x14] sm:$0xf] %vm725, %v722
        %732 = vst.msk [vmem:[%s221 + $0x18] sm:$0xf] %vm725, %v723
        %733 = vst.msk [vmem:[%s221 + $0x1c] sm:$0xf] %vm725, %v724
        %s734 = sand.u32 %s101, 1
        %s735 = scalar_lea.sflag [#allocation4], %s734
        %s736 = sand.u32 %s101, 1
        %s737 = smul.addr %s736, 32
        %s738 = scalar_lea.vmem [#allocation5], %s737
        %s739 = sand.u32 %s127, 1
        %s740 = scalar_lea.sflag [#allocation7], %s739
        %s741 = sand.u32 %s127, 1
        %s742 = smul.addr %s741, 2
        %s743 = scalar_lea.vmem [#allocation6], %s742
        // Predicated region
        $region37: #{tpu_custom_call.1} parent=31 // pred_check
          %p744 = pneg %p111
        $region38: #{tpu_custom_call.1} parent=31 // pred_check_branch
          %746 = sbr.rel (%p744) target = $region40
        $region39: #{tpu_custom_call.1} parent=31 // pred_region
          %748 = vsyncadd %s735, 0
          %s749 = smul.addr %s25, 8
          %s750 = smul.addr %s749, 4
          %s751 = scalar_lea.hbm %s3, %s750
          %s752 = sshll.u32 %s738, 4
          %s753 = int_to_ptr.vmem [resolvable:$true] %s752
          %s754 = sshll.u32 %s751, 4
          %s755 = int_to_ptr.hbm [resolvable:$true] %s754
          %760 = dma.vmem_to_hbm [thread:$0]  %s753, 512, %s755, %s735, 64, 64, 4
        $region40: #{tpu_custom_call.1} parent=31 // pred_fallthru
          _
        // Predicated region
        $region41: #{tpu_custom_call.1} parent=31 // pred_check
          %p761 = pneg %p137
        $region42: #{tpu_custom_call.1} parent=31 // pred_check_branch
          %763 = sbr.rel (%p761) target = $region44
        $region43: #{tpu_custom_call.1} parent=31 // pred_region
          %765 = vsyncadd %s740, 0
          %s766 = smul.addr %s25, 2
          %s767 = scalar_lea.hbm %s4, %s766
          %s769 = sshll.u32 %s743, 4
          %s770 = int_to_ptr.vmem [resolvable:$true] %s769
          %s771 = sshll.u32 %s767, 4
          %s772 = int_to_ptr.hbm [resolvable:$true] %s771
          %774 = dma.vmem_to_hbm [thread:$0]  %s770, 32, %s772, %s740
        $region44: #{tpu_custom_call.1} parent=31 // pred_fallthru
          _
      $region32: #{tpu_custom_call.1} parent=5 // pred_fallthru
        _
      %p775 = scmp.le.s32.totalorder 2, %s20
      // Predicated region
      $region45: #{tpu_custom_call.1} parent=5 // pred_check
        %p776 = pneg %p775
      $region46: #{tpu_custom_call.1} parent=5 // pred_check_branch
        %778 = sbr.rel (%p776) target = $region48
      $region47: #{tpu_custom_call.1} parent=5 // pred_region
        %s779 = ssub.s32 %s20, 2
        // Predicated region
        $region49: #{tpu_custom_call.1} parent=47 // pred_check
          %p780 = pneg %p117
        $region50: #{tpu_custom_call.1} parent=47 // pred_check_branch
          %782 = sbr.rel (%p780) target = $region52
        $region51: #{tpu_custom_call.1} parent=47 // pred_region
          %s783 = sand.u32 %s102, 1
          %s784 = scalar_lea.sflag [#allocation4], %s783
          %s785 = sand.u32 %s102, 1
          %s786 = smul.addr %s785, 32
          %s787 = scalar_lea.vmem [#allocation5], %s786
          %789 = dma.done %s784, 512
        $region52: #{tpu_custom_call.1} parent=47 // pred_fallthru
          _
        // Predicated region
        $region53: #{tpu_custom_call.1} parent=47 // pred_check
          %p790 = pneg %p143
        $region54: #{tpu_custom_call.1} parent=47 // pred_check_branch
          %792 = sbr.rel (%p790) target = $region56
        $region55: #{tpu_custom_call.1} parent=47 // pred_region
          %s793 = sand.u32 %s128, 1
          %s794 = scalar_lea.sflag [#allocation7], %s793
          %s795 = sand.u32 %s128, 1
          %s796 = smul.addr %s795, 2
          %s797 = scalar_lea.vmem [#allocation6], %s796
          %799 = dma.done %s794, 32
        $region56: #{tpu_custom_call.1} parent=47 // pred_fallthru
          _
      $region48: #{tpu_custom_call.1} parent=5 // pred_fallthru
        _
    $region6: #{tpu_custom_call.1} parent=1 // loop_footer
      %s24 = sadd.s32 1, %s20
    $region7: #{tpu_custom_call.1} parent=1 // loop_footer_branch
      %19 = sbr.rel target = $region3
    $region8: #{tpu_custom_call.1} parent=1 // loop_exit
      _
    %800 = vsyncpa [#allocation3], 1
    %s801 = scalar_lea.sflag [#allocation3], 1
    %802 = vsyncpa %s801, 1
    %803 = vsyncpa [#allocation4], 1
    %s804 = scalar_lea.sflag [#allocation4], 1
    %805 = vsyncpa %s804, 1
    %806 = vsyncpa [#allocation7], 1
    %s807 = scalar_lea.sflag [#allocation7], 1
    %808 = vsyncpa %s807, 1

</llo_original>
